<compile_context>
chip_gen: v6e
topology: v6e:2x2x1
jax: 0.10.0
libtpu: 0.0.40
codegen_flags: <defaults>
</compile_context>

<pallas_src>
import jax
import jax.numpy as jnp
from jax.experimental import pallas as pl
from jax.experimental.pallas import tpu as pltpu


def _head_kernel(w_ref, e_ref, o_ref):
    # o[c, n_tile] = sum_d W[c, d] * E[d, n_tile]   (lane-dense: nodes in the lane dim)
    o_ref[...] = jnp.dot(w_ref[...], e_ref[...],
                         preferred_element_type=jnp.float32)


def supervised_graphsage_scores(weight, embeds, *, tile_n=2048):
    """weight: (num_classes, embed_dim) f32, embeds: (embed_dim, num_nodes) f32
    returns scores: (num_nodes, num_classes) f32  ==  weight.mm(embeds).t()"""
    num_classes, embed_dim = weight.shape
    embed_dim2, num_nodes = embeds.shape
    assert embed_dim == embed_dim2

    # Node tile: multiple of 256 (fills 256-wide MXU on v6e/v7x; also a multiple of
    # the 128-lane vreg), capped so double-buffered tiles stay tiny vs. VMEM.
    tile_n = max(256, min(tile_n, pl.cdiv(num_nodes, 256) * 256))
    padded_n = pl.cdiv(num_nodes, tile_n) * tile_n
    if padded_n != num_nodes:
        # Zero columns contribute zero scores and are sliced off below.
        embeds = jnp.pad(embeds, ((0, 0), (0, padded_n - num_nodes)))

    grid = (padded_n // tile_n,)

    cost = pl.CostEstimate(
        flops=2 * num_classes * embed_dim * padded_n,
        transcendentals=0,
        bytes_accessed=(weight.size + embed_dim * padded_n
                        + num_classes * padded_n) * 4,
    )

    scores_cn = pl.pallas_call(
        _head_kernel,
        out_shape=jax.ShapeDtypeStruct((num_classes, padded_n), jnp.float32),
        grid=grid,
        in_specs=[
            # weight stays resident across all node tiles
            pl.BlockSpec((num_classes, embed_dim), lambda i: (0, 0)),
            # one column-tile of embeddings per grid step (double-buffered DMA)
            pl.BlockSpec((embed_dim, tile_n), lambda i: (0, i)),
        ],
        out_specs=pl.BlockSpec((num_classes, tile_n), lambda i: (0, i)),
        compiler_params=pltpu.CompilerParams(
            # node tiles are independent -> shard across TCs on v7x
            dimension_semantics=("parallel",)),
        cost_estimate=cost,
    )(weight, embeds)

    # Logical transpose back to the module's return layout: (num_nodes, num_classes).
    return scores_cn[:, :num_nodes].T


def xavier_uniform(key, shape):
    fan_out, fan_in = shape
    bound = (6.0 / (fan_in + fan_out)) ** 0.5
    return jax.random.uniform(key, shape, jnp.float32, minval=-bound, maxval=bound)


def toy_encoder(key, nodes, num_total_nodes, num_feats, embed_dim):
    """Deterministic stand-in for `enc(nodes)` (the Encoder module is external to
    SupervisedGraphSage).  Mean-aggregate neighbor features, concat with self
    features, linear + relu -> (embed_dim, num_nodes), matching the repo's Encoder.
    Kept in plain JAX as glue; the module's own compute is in the Pallas kernel."""
    # TODO(synk): the real GraphSAGE Encoder/MeanAggregator stack is a separate
    # module; this is a deterministic functional stand-in with the same output shape.
    kf, ka, kw = jax.random.split(key, 3)
    feats = jax.random.normal(kf, (num_total_nodes, num_feats), jnp.float32)
    adj = (jax.random.uniform(ka, (nodes.shape[0], num_total_nodes)) < 0.25
           ).astype(jnp.float32)
    deg = jnp.maximum(adj.sum(axis=1, keepdims=True), 1.0)
    agg = (adj @ feats) / deg                       # (num_nodes, num_feats)
    self_feats = feats[nodes]                       # (num_nodes, num_feats)
    combined = jnp.concatenate([self_feats, agg], axis=1)   # (num_nodes, 2F)
    w_enc = xavier_uniform(kw, (embed_dim, 2 * num_feats))
    return jax.nn.relu(w_enc @ combined.T)          # (embed_dim, num_nodes)


if __name__ == "__main__":
    num_classes = 7
    embed_dim = 128
    num_nodes = 8          # batch of node ids
    num_total_nodes = 64
    num_feats = 32

    key = jax.random.PRNGKey(0)
    k_enc, k_w = jax.random.split(key)

    nodes = jnp.arange(num_nodes, dtype=jnp.int32)
    embeds = toy_encoder(k_enc, nodes, num_total_nodes, num_feats, embed_dim)

    # self.weight = nn.Parameter(FloatTensor(num_classes, enc.embed_dim)); xavier_uniform
    weight = xavier_uniform(k_w, (num_classes, embed_dim))

    scores = supervised_graphsage_scores(weight, embeds)
    scores = jax.block_until_ready(scores)

    # Reference: scores = weight.mm(embeds).t()
    ref = (weight @ embeds).T
    assert scores.shape == (num_nodes, num_classes)
    assert jnp.allclose(scores, ref, atol=1e-4, rtol=1e-4), "mismatch vs reference"
    print("KERNEL_OK")
</pallas_src>

<mosaic_0001>
module attributes {stable_mosaic.version = 11 : i64} {
  func.func @_head_kernel(%arg0: i32, %arg1: memref<7x128xf32, #tpu.memory_space<vmem>>, %arg2: memref<128x256xf32, #tpu.memory_space<vmem>>, %arg3: memref<7x256xf32, #tpu.memory_space<vmem>>) attributes {dimension_semantics = [#tpu.dimension_semantics<parallel>], iteration_bounds = array<i64: 1>, scalar_prefetch = 0 : i64, scratch_operands = 0 : i64, tpu.core_type = #tpu.core_type<tc>, window_params = [{pipeline_mode = #tpu.pipeline_mode<synchronous>, transform_indices = @transform_0, window_bounds = array<i64: 7, 128>}, {transform_indices = @transform_1, window_bounds = array<i64: 128, 256>}, {transform_indices = @transform_2, window_bounds = array<i64: 7, 256>}]} {
    %c0 = arith.constant 0 : index
    %c0_0 = arith.constant 0 : index
    %0 = vector.load %arg1[%c0, %c0_0] : memref<7x128xf32, #tpu.memory_space<vmem>>, vector<7x128xf32>
    %c0_1 = arith.constant 0 : index
    %c0_2 = arith.constant 0 : index
    %1 = vector.load %arg2[%c0_1, %c0_2] : memref<128x256xf32, #tpu.memory_space<vmem>>, vector<128x256xf32>
    %cst = arith.constant dense<0.000000e+00> : vector<7x256xf32>
    %2 = tpu.matmul %0, %1, %cst {dimension_numbers = #tpu.dot_dimension_numbers<[1], [0], [0], [1], [0, 0, 1, 1], [], []>} : vector<7x128xf32>, vector<128x256xf32>, vector<7x256xf32> -> vector<7x256xf32>
    %c0_3 = arith.constant 0 : index
    %c0_4 = arith.constant 0 : index
    %3 = vector.load %arg3[%c0_3, %c0_4] : memref<7x256xf32, #tpu.memory_space<vmem>>, vector<7x256xf32>
    tpu.vector_store %arg3[%c0_3, %c0_4], %2 {strides = array<i32>} : memref<7x256xf32, #tpu.memory_space<vmem>>, vector<7x256xf32>,
    return
  }
  func.func @transform_0(%arg0: i32) -> (i32, i32) {
    %c0_i32 = arith.constant 0 : i32
    %c0_i32_0 = arith.constant 0 : i32
    %c0_i32_1 = arith.constant 0 : i32
    return %c0_i32, %c0_i32_0 : i32, i32
  }
  func.func @transform_1(%arg0: i32) -> (i32, i32) {
    %c0_i32 = arith.constant 0 : i32
    %c0_i32_0 = arith.constant 0 : i32
    return %c0_i32, %arg0 : i32, i32
  }
  func.func @transform_2(%arg0: i32) -> (i32, i32) {
    %c0_i32 = arith.constant 0 : i32
    %c0_i32_0 = arith.constant 0 : i32
    return %c0_i32, %arg0 : i32, i32
  }
}

</mosaic_0001>

<llo_original>
// kernel: tpu_custom_call.1
$region0: #{tpu_custom_call.1}
  #allocation0 [shape = 'u32[]', space=smem, size = 0x4, offset = 0x4, fixed_abs, tag = 'smem constant byte address 0x4 - core index']
  #allocation1 [shape = 'u32[144,128]{1,0:T(1,128)}', space=vmem, size = 0x12000, scoped, tag = 'internal scratch']
  %s0 = inlined_call_operand.hbm [shape: f32[7,128], index: 0, kind: input, shape index: {}]
  %s1 = inlined_call_operand.hbm [shape: f32[128,256], index: 1, kind: input, shape index: {}]
  %s2 = inlined_call_operand.hbm [shape: f32[7,256], index: 2, kind: output, shape index: {}]
  %s3 = sld [smem:[#allocation0]]
  $region26: #{tpu_custom_call.1} parent=0
    _
  %s5 = ssub.s32 1, %s3
  %s6 = scalar_select 0, %s5, %s3
  $region1: #{tpu_custom_call.1} parent=0
    #allocation2 [shape = 'u8[4096]{0}', space=vmem, size = 0x1000, scoped, tag = 'input window, operand 0, single buffered']
    #allocation3 [shape = 's32[1]{0}', space=sflag, size = 0x4, scoped, tag = 'scoped memory for tpu_custom_call.1']
    #allocation4 [shape = 's32[1]{0}', space=sflag, size = 0x4, scoped, tag = 'scoped memory for tpu_custom_call.1']
    #allocation5 [shape = 'u8[131072]{0}', space=vmem, size = 0x20000, scoped, tag = 'input window, operand 1, single buffered']
    #allocation6 [shape = 's32[1]{0}', space=sflag, size = 0x4, scoped, tag = 'scoped memory for tpu_custom_call.1']
    #allocation7 [shape = 'u8[8192]{0}', space=vmem, size = 0x2000, scoped, tag = 'output window, operand 0, single buffered']
    %7 = vsyncpa [#allocation3], 0
    %8 = vsyncpa [#allocation6], 0
    %9 = vsyncpa [#allocation4], 0
    // Predicated region
    $region2: #{tpu_custom_call.1} parent=1 // pred_check
      _
    $region3: #{tpu_custom_call.1} parent=1 // pred_check_branch
      %11 = sbr.rel (0) target = $region5
    $region4: #{tpu_custom_call.1} parent=1 // pred_region
      %s13 = ssub.s32 128, 128
      %14 = vsyncadd [#allocation3], %s13
      %s16 = sshll.u32 [#allocation2], 4
      %s17 = int_to_ptr.vmem [resolvable:$true] %s16
      %19 = dma.hbm_to_vmem [thread:$0]  %s0, 128, %s17, [#allocation3]
    $region5: #{tpu_custom_call.1} parent=1 // pred_fallthru
      _
    // Predicated region
    $region6: #{tpu_custom_call.1} parent=1 // pred_check
      _
    $region7: #{tpu_custom_call.1} parent=1 // pred_check_branch
      %21 = sbr.rel (0) target = $region9
    $region8: #{tpu_custom_call.1} parent=1 // pred_region
      %s23 = ssub.s32 4096, 4096
      %24 = vsyncadd [#allocation6], %s23
      %s25 = sshll.u32 [#allocation5], 4
      %s26 = int_to_ptr.vmem [resolvable:$true] %s25
      %31 = dma.hbm_to_vmem [thread:$0]  %s1, 4096, %s26, [#allocation6], 256, 256, 16
    $region9: #{tpu_custom_call.1} parent=1 // pred_fallthru
      _
    // Predicated region
    $region10: #{tpu_custom_call.1} parent=1 // pred_check
      _
    $region11: #{tpu_custom_call.1} parent=1 // pred_check_branch
      %33 = sbr.rel (0) target = $region13
    $region12: #{tpu_custom_call.1} parent=1 // pred_region
      %34 = dma.done [#allocation3], 128
    $region13: #{tpu_custom_call.1} parent=1 // pred_fallthru
      _
    // Predicated region
    $region14: #{tpu_custom_call.1} parent=1 // pred_check
      _
    $region15: #{tpu_custom_call.1} parent=1 // pred_check_branch
      %36 = sbr.rel (0) target = $region17
    $region16: #{tpu_custom_call.1} parent=1 // pred_region
      %37 = dma.done [#allocation6], 4096
    $region17: #{tpu_custom_call.1} parent=1 // pred_fallthru
      _
    %v38 = vld [vmem:[#allocation2] sm:$0x7f]
    %v39 = vld [vmem:[#allocation5] sm:$0xff]
    %v40 = vld [vmem:[#allocation5 + $0x8] sm:$0xff]
    %v41 = vld [vmem:[#allocation5 + $0x10] sm:$0xff]
    %v42 = vld [vmem:[#allocation5 + $0x18] sm:$0xff]
    %v43 = vld [vmem:[#allocation5 + $0x20] sm:$0xff]
    %v44 = vld [vmem:[#allocation5 + $0x28] sm:$0xff]
    %v45 = vld [vmem:[#allocation5 + $0x30] sm:$0xff]
    %v46 = vld [vmem:[#allocation5 + $0x38] sm:$0xff]
    %v47 = vld [vmem:[#allocation5 + $0x40] sm:$0xff]
    %v48 = vld [vmem:[#allocation5 + $0x48] sm:$0xff]
    %v49 = vld [vmem:[#allocation5 + $0x50] sm:$0xff]
    %v50 = vld [vmem:[#allocation5 + $0x58] sm:$0xff]
    %v51 = vld [vmem:[#allocation5 + $0x60] sm:$0xff]
    %v52 = vld [vmem:[#allocation5 + $0x68] sm:$0xff]
    %v53 = vld [vmem:[#allocation5 + $0x70] sm:$0xff]
    %v54 = vld [vmem:[#allocation5 + $0x78] sm:$0xff]
    %v55 = vld [vmem:[#allocation5 + $0x80] sm:$0xff]
    %v56 = vld [vmem:[#allocation5 + $0x88] sm:$0xff]
    %v57 = vld [vmem:[#allocation5 + $0x90] sm:$0xff]
    %v58 = vld [vmem:[#allocation5 + $0x98] sm:$0xff]
    %v59 = vld [vmem:[#allocation5 + $0xa0] sm:$0xff]
    %v60 = vld [vmem:[#allocation5 + $0xa8] sm:$0xff]
    %v61 = vld [vmem:[#allocation5 + $0xb0] sm:$0xff]
    %v62 = vld [vmem:[#allocation5 + $0xb8] sm:$0xff]
    %v63 = vld [vmem:[#allocation5 + $0xc0] sm:$0xff]
    %v64 = vld [vmem:[#allocation5 + $0xc8] sm:$0xff]
    %v65 = vld [vmem:[#allocation5 + $0xd0] sm:$0xff]
    %v66 = vld [vmem:[#allocation5 + $0xd8] sm:$0xff]
    %v67 = vld [vmem:[#allocation5 + $0xe0] sm:$0xff]
    %v68 = vld [vmem:[#allocation5 + $0xe8] sm:$0xff]
    %v69 = vld [vmem:[#allocation5 + $0xf0] sm:$0xff]
    %v70 = vld [vmem:[#allocation5 + $0xf8] sm:$0xff]
    %71 = vmatprep.subr.mxu0 %v70
    %72 = vmatpush1.msra.mxu0 %v69
    %73 = vmatprep.subr.mxu0 %v68
    %74 = vmatpush1.msra.mxu0 %v67
    %75 = vmatprep.subr.mxu0 %v66
    %76 = vmatpush1.msra.mxu0 %v65
    %77 = vmatprep.subr.mxu0 %v64
    %78 = vmatpush1.msra.mxu0 %v63
    %79 = vmatprep.subr.mxu0 %v62
    %80 = vmatpush1.msra.mxu0 %v61
    %81 = vmatprep.subr.mxu0 %v60
    %82 = vmatpush1.msra.mxu0 %v59
    %83 = vmatprep.subr.mxu0 %v58
    %84 = vmatpush1.msra.mxu0 %v57
    %85 = vmatprep.subr.mxu0 %v56
    %86 = vmatpush1.msra.mxu0 %v55
    %87 = vmatprep.subr.mxu0 %v54
    %88 = vmatpush1.msra.mxu0 %v53
    %89 = vmatprep.subr.mxu0 %v52
    %90 = vmatpush1.msra.mxu0 %v51
    %91 = vmatprep.subr.mxu0 %v50
    %92 = vmatpush1.msra.mxu0 %v49
    %93 = vmatprep.subr.mxu0 %v48
    %94 = vmatpush1.msra.mxu0 %v47
    %95 = vmatprep.subr.mxu0 %v46
    %96 = vmatpush1.msra.mxu0 %v45
    %97 = vmatprep.subr.mxu0 %v44
    %98 = vmatpush1.msra.mxu0 %v43
    %99 = vmatprep.subr.mxu0 %v42
    %100 = vmatpush1.msra.mxu0 %v41
    %101 = vmatprep.subr.mxu0 %v40
    %102 = vmatpush1.msra.mxu0 %v39
    %103 = vmatprep.subr.mxu0 0.0
    %104 = vmatpush2.msra.mxu0 0.0
    %105 = vmatprep.subr.mxu0 0.0
    %106 = vmatpush2.msra.mxu0 0.0
    %107 = vmatprep.subr.mxu0 0.0
    %108 = vmatpush2.msra.mxu0 0.0
    %109 = vmatprep.subr.mxu0 0.0
    %110 = vmatpush2.msra.mxu0 0.0
    %111 = vmatprep.subr.mxu0 0.0
    %112 = vmatpush2.msra.mxu0 0.0
    %113 = vmatprep.subr.mxu0 0.0
    %114 = vmatpush2.msra.mxu0 0.0
    %115 = vmatprep.subr.mxu0 0.0
    %116 = vmatpush2.msra.mxu0 0.0
    %117 = vmatprep.subr.mxu0 0.0
    %118 = vmatpush2.msra.mxu0 0.0
    %119 = vmatprep.subr.mxu0 0.0
    %120 = vmatpush2.msra.mxu0 0.0
    %121 = vmatprep.subr.mxu0 0.0
    %122 = vmatpush2.msra.mxu0 0.0
    %123 = vmatprep.subr.mxu0 0.0
    %124 = vmatpush2.msra.mxu0 0.0
    %125 = vmatprep.subr.mxu0 0.0
    %126 = vmatpush2.msra.mxu0 0.0
    %127 = vmatprep.subr.mxu0 0.0
    %128 = vmatpush2.msra.mxu0 0.0
    %129 = vmatprep.subr.mxu0 0.0
    %130 = vmatpush2.msra.mxu0 0.0
    %131 = vmatprep.subr.mxu0 0.0
    %132 = vmatpush2.msra.mxu0 0.0
    %133 = vmatprep.subr.mxu0 0.0
    %134 = vmatpush2.msra.mxu0 0.0
    %135 = vmatprep.mubr.f32.mxu0 0.0
    %136 = vmatmul.mubr.f32.gmra.mxu0 %v38
    %v137 = vpop.f32.mrf.mxu0
    %v138 = vadd.f32 0.0, %v137
    %v139 = vpop.f32.mrf.mxu0
    %v140 = vadd.f32 0.0, %v139
    %141 = vdwg.mxu0
    %142 = vst [vmem:[#allocation7] sm:$0x7f] %v138
    %143 = vst [vmem:[#allocation7 + $0x8] sm:$0x7f] %v140
    // Predicated region
    $region18: #{tpu_custom_call.1} parent=1 // pred_check
      _
    $region19: #{tpu_custom_call.1} parent=1 // pred_check_branch
      %145 = sbr.rel (0) target = $region21
    $region20: #{tpu_custom_call.1} parent=1 // pred_region
      %s147 = ssub.s32 256, 256
      %148 = vsyncadd [#allocation4], %s147
      %s150 = sshll.u32 [#allocation7], 4
      %s151 = int_to_ptr.vmem [resolvable:$true] %s150
      %153 = dma.vmem_to_hbm [thread:$0]  %s151, 256, %s2, [#allocation4]
    $region21: #{tpu_custom_call.1} parent=1 // pred_fallthru
      _
    // Predicated region
    $region22: #{tpu_custom_call.1} parent=1 // pred_check
      _
    $region23: #{tpu_custom_call.1} parent=1 // pred_check_branch
      %155 = sbr.rel (0) target = $region25
    $region24: #{tpu_custom_call.1} parent=1 // pred_region
      %156 = dma.done [#allocation4], 256
    $region25: #{tpu_custom_call.1} parent=1 // pred_fallthru
      _
    %157 = vsyncpa [#allocation3], 1
    %158 = vsyncpa [#allocation6], 1
    %159 = vsyncpa [#allocation4], 1

</llo_original>
